<compile_context>
chip_gen: v7x
topology: tpu7x:2x2x1
jax: 0.10.0
libtpu: 0.0.40
codegen_flags: <defaults>
</compile_context>

<pallas_src>
import math

import jax
import jax.numpy as jnp
from jax.experimental import pallas as pl
from jax.experimental.pallas import tpu as pltpu


_LANE = 128
_WEIGHT_VMEM_BUDGET = 16 * 1024 * 1024   # cap on the resident bf16 weight block


def _linear_kernel(x_ref, w_ref, b_ref, o_ref):
    """One (TM, C) @ (C, TF) tile of hidden @ W^T + b; f32 accumulation on the MXU."""
    y = jnp.dot(x_ref[...], w_ref[...], preferred_element_type=jnp.float32)
    o_ref[...] = (y + b_ref[...]).astype(o_ref.dtype)


def _round_up(x, m):
    return ((x + m - 1) // m) * m


def _pick_row_tile(m_total):
    """Row tile TM: target 256-512 rows; >=2 grid steps when there is enough work."""
    if m_total <= 256:
        return m_total                      # single full-extent block (tiny inputs)
    return min(512, _round_up(pl.cdiv(m_total, 2), 8))


def _pick_f_tile(c, f):
    """Output-feature tile TF (extra grid axis only when the bf16 weight is huge)."""
    if f % _LANE == 0 and 2 * c * f > _WEIGHT_VMEM_BUDGET:
        return max(_LANE, (_WEIGHT_VMEM_BUDGET // (2 * c)) // _LANE * _LANE)
    # TODO(synk): when F is not a multiple of 128 the output stores are masked
    # (vst.msk); keeping a lane-padded F through to the consumer would avoid that,
    # but we deliberately do not pad + post-slice (extra full-output HBM pass).
    return f


def _vmem_limit_bytes(est_bytes):
    """Generation-aware scoped-VMEM budget: ~75% of physical VMEM."""
    try:
        cap = int(pltpu.get_tpu_info().vmem_capacity_bytes)
    except Exception:
        cap = 64 * 1024 * 1024              # conservative (v7x) if query unavailable
    budget = (cap * 3) // 4                  # ~96 MiB on v5e/v6e, ~48 MiB on v7x
    return int(min(max(2 * est_bytes, 16 * 1024 * 1024), budget))


def vpt_layer_forward(inputs, prompt_embeddings, weight, bias,
                      patch_h: int, patch_w: int, out_dtype=None):
    """
    inputs:            (B, N, C) or (B, H, W, C) float32
    prompt_embeddings: (1, P, C)
    weight:            (out_features, C)   (PyTorch nn.Linear layout)
    bias:              (out_features,)
    out_dtype:         output dtype (default: inputs.dtype; pass jnp.bfloat16 to
                       halve the output writeback of this HBM-bound op).
    """
    if inputs.ndim == 4:
        B = inputs.shape[0]
        C = inputs.shape[-1]
        inputs = inputs.reshape(B, -1, C)
    B, N, C = inputs.shape
    P = prompt_embeddings.shape[1]
    F = weight.shape[0]
    if out_dtype is None:
        out_dtype = inputs.dtype

    has_cls = (N % 2 == 1)
    if has_cls:
        if N < 1 + P:
            raise ValueError(f"odd-N branch needs N >= 1 + prompt_tokens, got N={N}, P={P}")
        start_row = 1
    else:
        if N < P:
            raise ValueError(f"even-N branch needs N >= prompt_tokens, got N={N}, P={P}")
        if N != patch_h * patch_w:
            # The PyTorch module reshapes hidden to (B, ph, pw, -1) before the Linear;
            # that is only consistent with in_features=C when N == ph*pw.
            raise ValueError(f"even-N branch requires N == patch_h*patch_w "
                             f"(got N={N}, ph*pw={patch_h * patch_w})")
        start_row = 0

    # ---- Wrapper-side prep (fused by XLA): splice prompt rows, cast to bf16. ----
    # prompt_project=-1 -> prompt_proj is Identity; lora_dropout=0.0 -> Dropout no-op.
    # TODO(synk): prompt_project > -1 (extra prompt Linear) / dropout p > 0 untouched.
    prompt_rows = jnp.broadcast_to(prompt_embeddings, (B, P, C)).astype(jnp.bfloat16)
    hidden = inputs.astype(jnp.bfloat16).at[:, start_row:start_row + P, :].set(prompt_rows)
    hidden2d = hidden.reshape(B * N, C)                      # free metadata reshape

    w_t = weight.T.astype(jnp.bfloat16)                      # (C, F) bf16, resident
    b_row = bias.astype(jnp.float32).reshape(1, F)

    # ---- Tiling. ----
    M = B * N
    TM = _pick_row_tile(M)
    TF = _pick_f_tile(C, F)
    grid_m = pl.cdiv(M, TM)
    grid_f = pl.cdiv(F, TF)

    out_itemsize = jnp.dtype(out_dtype).itemsize
    single_buffer_invariants = (grid_f == 1) and hasattr(pl, "Buffered")
    n_w_buf = 1 if single_buffer_invariants else 2
    est = (2 * TM * C * 2                    # x block, bf16, double-buffered
           + 2 * TM * TF * out_itemsize      # out block, double-buffered
           + n_w_buf * C * TF * 2            # transposed weight, bf16
           + n_w_buf * 8 * TF * 4)           # bias row (sublane-padded)
    vmem_limit = _vmem_limit_bytes(est)

    def run(single_buf: bool):
        res_kw = dict(pipeline_mode=pl.Buffered(1)) if single_buf else {}
        return pl.pallas_call(
            _linear_kernel,
            out_shape=jax.ShapeDtypeStruct((M, F), out_dtype),
            grid_spec=pltpu.PrefetchScalarGridSpec(
                num_scalar_prefetch=0,
                grid=(grid_m, grid_f),
                in_specs=[
                    pl.BlockSpec((TM, C), lambda i, j: (i, 0)),            # activations
                    pl.BlockSpec((C, TF), lambda i, j: (0, j), **res_kw),  # W^T (bf16)
                    pl.BlockSpec((1, TF), lambda i, j: (0, j), **res_kw),  # bias
                ],
                out_specs=pl.BlockSpec((TM, TF), lambda i, j: (i, j)),
            ),
            compiler_params=pltpu.CompilerParams(
                dimension_semantics=("parallel", "parallel"),
                vmem_limit_bytes=vmem_limit),
        )(hidden2d, w_t, b_row)

    if single_buffer_invariants:
        try:
            out2d = run(True)
        except Exception:
            # pipeline_mode=pl.Buffered(1) not supported on this jax build; fall back
            # to default double-buffering of the invariant operands.
            out2d = run(False)
    else:
        out2d = run(False)

    out = out2d.reshape(B, N, F)
    if not has_cls:
        # Even-N branch: PyTorch reshapes hidden before the Linear; with N == ph*pw
        # the Linear is per-token, so reshaping the output afterwards is equivalent.
        out = out.reshape(B, patch_h, patch_w, F)
    return out


def _reference_forward(inputs, prompt_embeddings, weight, bias,
                       patch_h: int, patch_w: int):
    """Plain-JAX f32 reference mirroring the PyTorch module."""
    if inputs.ndim == 4:
        B = inputs.shape[0]
        C = inputs.shape[-1]
        inputs = inputs.reshape(B, -1, C)
    B, N, C = inputs.shape
    P = prompt_embeddings.shape[1]
    prompt = jnp.broadcast_to(prompt_embeddings, (B, P, C))
    if N % 2 == 1:
        hidden = jnp.concatenate(
            [inputs[:, :1, :], prompt, inputs[:, 1 + P:, :]], axis=1)
        return hidden @ weight.T + bias
    else:
        hidden = jnp.concatenate([prompt, inputs[:, P:, :]], axis=1)
        hidden = hidden.reshape(B, patch_h, patch_w, -1)
        return hidden @ weight.T + bias


if __name__ == "__main__":
    key = jax.random.PRNGKey(0)
    k_prompt, k_w, k_b, k_x1, k_x2 = jax.random.split(key, 5)

    # Small but lane-aligned shapes (C, F multiples of 128 -> lane-dense blocks).
    B = 2
    C = 128                # in_features (= prompt_dim, since prompt_project=-1)
    F = 128                # out_features
    P = 8                  # prompt_tokens
    patch_h = patch_w = 4  # 16 patches

    # prompt_embeddings ~ U(-val, val), val = sqrt(6 / (3*14*14 + prompt_dim))
    val = math.sqrt(6.0 / float(3 * 14 * 14 + C))
    prompt_embeddings = jax.random.uniform(
        k_prompt, (1, P, C), jnp.float32, minval=-val, maxval=val)

    # base_layer = nn.Linear(C, F): synthetic deterministic params.
    bound = 1.0 / math.sqrt(C)
    weight = jax.random.uniform(k_w, (F, C), jnp.float32, minval=-bound, maxval=bound)
    bias = jax.random.uniform(k_b, (F,), jnp.float32, minval=-bound, maxval=bound)

    # Case 1: N odd (CLS + prompt slots + patches) -> N = 1 + 8 + 16 = 25.
    x_odd = jax.random.normal(k_x1, (B, 1 + P + patch_h * patch_w, C), jnp.float32)
    out_odd = jax.block_until_ready(
        vpt_layer_forward(x_odd, prompt_embeddings, weight, bias, patch_h, patch_w))
    ref_odd = _reference_forward(x_odd, prompt_embeddings, weight, bias,
                                 patch_h, patch_w)
    assert out_odd.shape == ref_odd.shape
    # bf16 matmul operands -> loosened tolerance vs the f32 reference.
    assert jnp.allclose(out_odd, ref_odd, atol=3e-2, rtol=3e-2)

    # Case 2: N even, 4D input (B, ph, pw, C) with N = ph*pw = 16 (>= P).
    x_even = jax.random.normal(k_x2, (B, patch_h, patch_w, C), jnp.float32)
    out_even = jax.block_until_ready(
        vpt_layer_forward(x_even, prompt_embeddings, weight, bias, patch_h, patch_w))
    ref_even = _reference_forward(x_even, prompt_embeddings, weight, bias,
                                  patch_h, patch_w)
    assert out_even.shape == ref_even.shape
    assert jnp.allclose(out_even, ref_even, atol=3e-2, rtol=3e-2)

    # Case 3: bf16 output path (review: halve output writeback on this HBM-bound op).
    out_bf16 = jax.block_until_ready(
        vpt_layer_forward(x_odd, prompt_embeddings, weight, bias, patch_h, patch_w,
                          out_dtype=jnp.bfloat16))
    assert out_bf16.dtype == jnp.bfloat16
    assert jnp.allclose(out_bf16.astype(jnp.float32), ref_odd, atol=6e-2, rtol=6e-2)

    print("KERNEL_OK")
</pallas_src>

<mosaic_0001>
module attributes {stable_mosaic.version = 11 : i64} {
  func.func @_linear_kernel(%arg0: i32, %arg1: i32, %arg2: memref<50x128xbf16, #tpu.memory_space<vmem>>, %arg3: memref<128x128xbf16, #tpu.memory_space<vmem>>, %arg4: memref<1x128xf32, #tpu.memory_space<vmem>>, %arg5: memref<50x128xf32, #tpu.memory_space<vmem>>) attributes {dimension_semantics = [#tpu.dimension_semantics<parallel>, #tpu.dimension_semantics<parallel>], iteration_bounds = array<i64: 1, 1>, scalar_prefetch = 0 : i64, scratch_operands = 0 : i64, tpu.core_type = #tpu.core_type<tc>, window_params = [{transform_indices = @transform_0, window_bounds = array<i64: 50, 128>}, {pipeline_mode = #tpu.pipeline_mode<synchronous>, transform_indices = @transform_1, window_bounds = array<i64: 128, 128>}, {pipeline_mode = #tpu.pipeline_mode<synchronous>, transform_indices = @transform_2, window_bounds = array<i64: 1, 128>}, {transform_indices = @transform_3, window_bounds = array<i64: 50, 128>}]} {
    %c0 = arith.constant 0 : index
    %c0_0 = arith.constant 0 : index
    %0 = vector.load %arg2[%c0, %c0_0] : memref<50x128xbf16, #tpu.memory_space<vmem>>, vector<50x128xbf16>
    %c0_1 = arith.constant 0 : index
    %c0_2 = arith.constant 0 : index
    %1 = vector.load %arg3[%c0_1, %c0_2] : memref<128x128xbf16, #tpu.memory_space<vmem>>, vector<128x128xbf16>
    %cst = arith.constant dense<0.000000e+00> : vector<50x128xf32>
    %2 = tpu.matmul %0, %1, %cst {dimension_numbers = #tpu.dot_dimension_numbers<[1], [0], [0], [1], [0, 0, 1, 1], [], []>} : vector<50x128xbf16>, vector<128x128xbf16>, vector<50x128xf32> -> vector<50x128xf32>
    %c0_3 = arith.constant 0 : index
    %c0_4 = arith.constant 0 : index
    %3 = vector.load %arg4[%c0_3, %c0_4] : memref<1x128xf32, #tpu.memory_space<vmem>>, vector<1x128xf32>
    %4 = vector.broadcast %3 : vector<1x128xf32> to vector<50x128xf32>
    %5 = arith.addf %2, %4 : vector<50x128xf32>
    %c0_5 = arith.constant 0 : index
    %c0_6 = arith.constant 0 : index
    %6 = vector.load %arg5[%c0_5, %c0_6] : memref<50x128xf32, #tpu.memory_space<vmem>>, vector<50x128xf32>
    tpu.vector_store %arg5[%c0_5, %c0_6], %5 {strides = array<i32>} : memref<50x128xf32, #tpu.memory_space<vmem>>, vector<50x128xf32>,
    return
  }
  func.func @transform_0(%arg0: i32, %arg1: i32) -> (i32, i32) {
    %c0_i32 = arith.constant 0 : i32
    %c0_i32_0 = arith.constant 0 : i32
    return %arg0, %c0_i32 : i32, i32
  }
  func.func @transform_1(%arg0: i32, %arg1: i32) -> (i32, i32) {
    %c0_i32 = arith.constant 0 : i32
    %c0_i32_0 = arith.constant 0 : i32
    return %c0_i32, %arg1 : i32, i32
  }
  func.func @transform_2(%arg0: i32, %arg1: i32) -> (i32, i32) {
    %c0_i32 = arith.constant 0 : i32
    %c0_i32_0 = arith.constant 0 : i32
    return %c0_i32, %arg1 : i32, i32
  }
  func.func @transform_3(%arg0: i32, %arg1: i32) -> (i32, i32) {
    %c0_i32 = arith.constant 0 : i32
    return %arg0, %arg1 : i32, i32
  }
}

module attributes {stable_mosaic.version = 11 : i64} {
  func.func @_linear_kernel(%arg0: i32, %arg1: i32, %arg2: memref<50x128xbf16, #tpu.memory_space<vmem>>, %arg3: memref<128x128xbf16, #tpu.memory_space<vmem>>, %arg4: memref<1x128xf32, #tpu.memory_space<vmem>>, %arg5: memref<50x128xf32, #tpu.memory_space<vmem>>) attributes {dimension_semantics = [#tpu.dimension_semantics<parallel>, #tpu.dimension_semantics<parallel>], iteration_bounds = array<i64: 1, 1>, scalar_prefetch = 0 : i64, scratch_operands = 0 : i64, tpu.core_type = #tpu.core_type<tc>, window_params = [{transform_indices = @transform_0, window_bounds = array<i64: 50, 128>}, {transform_indices = @transform_1, window_bounds = array<i64: 128, 128>}, {transform_indices = @transform_2, window_bounds = array<i64: 1, 128>}, {transform_indices = @transform_3, window_bounds = array<i64: 50, 128>}]} {
    %c0 = arith.constant 0 : index
    %c0_0 = arith.constant 0 : index
    %0 = vector.load %arg2[%c0, %c0_0] : memref<50x128xbf16, #tpu.memory_space<vmem>>, vector<50x128xbf16>
    %c0_1 = arith.constant 0 : index
    %c0_2 = arith.constant 0 : index
    %1 = vector.load %arg3[%c0_1, %c0_2] : memref<128x128xbf16, #tpu.memory_space<vmem>>, vector<128x128xbf16>
    %cst = arith.constant dense<0.000000e+00> : vector<50x128xf32>
    %2 = tpu.matmul %0, %1, %cst {dimension_numbers = #tpu.dot_dimension_numbers<[1], [0], [0], [1], [0, 0, 1, 1], [], []>} : vector<50x128xbf16>, vector<128x128xbf16>, vector<50x128xf32> -> vector<50x128xf32>
    %c0_3 = arith.constant 0 : index
    %c0_4 = arith.constant 0 : index
    %3 = vector.load %arg4[%c0_3, %c0_4] : memref<1x128xf32, #tpu.memory_space<vmem>>, vector<1x128xf32>
    %4 = vector.broadcast %3 : vector<1x128xf32> to vector<50x128xf32>
    %5 = arith.addf %2, %4 : vector<50x128xf32>
    %c0_5 = arith.constant 0 : index
    %c0_6 = arith.constant 0 : index
    %6 = vector.load %arg5[%c0_5, %c0_6] : memref<50x128xf32, #tpu.memory_space<vmem>>, vector<50x128xf32>
    tpu.vector_store %arg5[%c0_5, %c0_6], %5 {strides = array<i32>} : memref<50x128xf32, #tpu.memory_space<vmem>>, vector<50x128xf32>,
    return
  }
  func.func @transform_0(%arg0: i32, %arg1: i32) -> (i32, i32) {
    %c0_i32 = arith.constant 0 : i32
    %c0_i32_0 = arith.constant 0 : i32
    return %arg0, %c0_i32 : i32, i32
  }
  func.func @transform_1(%arg0: i32, %arg1: i32) -> (i32, i32) {
    %c0_i32 = arith.constant 0 : i32
    %c0_i32_0 = arith.constant 0 : i32
    return %c0_i32, %arg1 : i32, i32
  }
  func.func @transform_2(%arg0: i32, %arg1: i32) -> (i32, i32) {
    %c0_i32 = arith.constant 0 : i32
    %c0_i32_0 = arith.constant 0 : i32
    return %c0_i32, %arg1 : i32, i32
  }
  func.func @transform_3(%arg0: i32, %arg1: i32) -> (i32, i32) {
    %c0_i32 = arith.constant 0 : i32
    return %arg0, %arg1 : i32, i32
  }
}

</mosaic_0001>

<llo_original>
// kernel: tpu_custom_call.1
$region0: #{tpu_custom_call.1}
  #allocation0 [shape = 'u32[]', space=smem, size = 0x4, offset = 0x4, fixed_abs, tag = 'smem constant byte address 0x4 - core index']
  #allocation1 [shape = 'u32[144,128]{1,0:T(1,128)}', space=vmem, size = 0x12000, scoped, tag = 'internal scratch']
  %s0 = inlined_call_operand.hbm [shape: bf16[50,128], index: 0, kind: input, shape index: {}]
  %s1 = inlined_call_operand.hbm [shape: bf16[128,128], index: 1, kind: input, shape index: {}]
  %s2 = inlined_call_operand.vmem [shape: f32[1,128], index: 2, kind: input, shape index: {}]
  %s3 = inlined_call_operand.hbm [shape: f32[50,128], index: 3, kind: output, shape index: {}]
  %s4 = sld [smem:[#allocation0]]
  $region30: #{tpu_custom_call.1} parent=0
    _
  %s6 = ssub.s32 1, %s4
  %s7 = scalar_select 0, %s6, %s4
  $region1: #{tpu_custom_call.1} parent=0
    #allocation2 [shape = 'u8[14336]{0}', space=vmem, size = 0x3800, scoped, tag = 'input window, operand 0, single buffered']
    #allocation3 [shape = 's32[1]{0}', space=sflag, size = 0x4, scoped, tag = 'scoped memory for tpu_custom_call.1']
    #allocation4 [shape = 's32[1]{0}', space=sflag, size = 0x4, scoped, tag = 'scoped memory for tpu_custom_call.1']
    #allocation5 [shape = 'u8[32768]{0}', space=vmem, size = 0x8000, scoped, tag = 'input window, operand 1, single buffered']
    #allocation6 [shape = 's32[1]{0}', space=sflag, size = 0x4, scoped, tag = 'scoped memory for tpu_custom_call.1']
    #allocation7 [shape = 'u8[28672]{0}', space=vmem, size = 0x7000, scoped, tag = 'output window, operand 0, single buffered']
    %8 = vsyncpa [#allocation3], 0
    %9 = vsyncpa [#allocation6], 0
    %10 = vsyncpa [#allocation4], 0
    // Predicated region
    $region2: #{tpu_custom_call.1} parent=1 // pred_check
      _
    $region3: #{tpu_custom_call.1} parent=1 // pred_check_branch
      %12 = sbr.rel (0) target = $region5
    $region4: #{tpu_custom_call.1} parent=1 // pred_region
      %s14 = ssub.s32 448, 448
      %15 = vsyncadd [#allocation3], %s14
      %s16 = sshll.u32 [#allocation2], 4
      %s17 = int_to_ptr.vmem [resolvable:$true] %s16
      %22 = dma.hbm_to_vmem [thread:$0]  %s0, 448, %s17, [#allocation3], 64, 64, 4
    $region5: #{tpu_custom_call.1} parent=1 // pred_fallthru
      _
    // Predicated region
    $region6: #{tpu_custom_call.1} parent=1 // pred_check
      _
    $region7: #{tpu_custom_call.1} parent=1 // pred_check_branch
      %24 = sbr.rel (0) target = $region9
    $region8: #{tpu_custom_call.1} parent=1 // pred_region
      %s26 = ssub.s32 1024, 1024
      %27 = vsyncadd [#allocation6], %s26
      %s28 = sshll.u32 [#allocation5], 4
      %s29 = int_to_ptr.vmem [resolvable:$true] %s28
      %34 = dma.hbm_to_vmem [thread:$0]  %s1, 1024, %s29, [#allocation6], 64, 64, 4
    $region9: #{tpu_custom_call.1} parent=1 // pred_fallthru
      _
    // Predicated region
    $region10: #{tpu_custom_call.1} parent=1 // pred_check
      _
    $region11: #{tpu_custom_call.1} parent=1 // pred_check_branch
      %36 = sbr.rel (0) target = $region13
    $region12: #{tpu_custom_call.1} parent=1 // pred_region
      _
    $region13: #{tpu_custom_call.1} parent=1 // pred_fallthru
      _
    // Predicated region
    $region14: #{tpu_custom_call.1} parent=1 // pred_check
      _
    $region15: #{tpu_custom_call.1} parent=1 // pred_check_branch
      %38 = sbr.rel (0) target = $region17
    $region16: #{tpu_custom_call.1} parent=1 // pred_region
      %39 = dma.done [#allocation3], 448
    $region17: #{tpu_custom_call.1} parent=1 // pred_fallthru
      _
    // Predicated region
    $region18: #{tpu_custom_call.1} parent=1 // pred_check
      _
    $region19: #{tpu_custom_call.1} parent=1 // pred_check_branch
      %41 = sbr.rel (0) target = $region21
    $region20: #{tpu_custom_call.1} parent=1 // pred_region
      %42 = dma.done [#allocation6], 1024
    $region21: #{tpu_custom_call.1} parent=1 // pred_fallthru
      _
    %v44 = vld [vmem:[#allocation2] sm:$0xf]
    %v45 = vld [vmem:[#allocation2 + $0x4] sm:$0xf]
    %v46 = vld [vmem:[#allocation2 + $0x8] sm:$0xf]
    %v47 = vld [vmem:[#allocation2 + $0xc] sm:$0xf]
    %v48 = vld [vmem:[#allocation2 + $0x10] sm:$0xf]
    %v49 = vld [vmem:[#allocation2 + $0x14] sm:$0xf]
    %v50 = vld [vmem:[#allocation2 + $0x18] sm:$0x1]
    %v51 = vld [vmem:[#allocation5] sm:$0xf]
    %v52 = vld [vmem:[#allocation5 + $0x4] sm:$0xf]
    %v53 = vld [vmem:[#allocation5 + $0x8] sm:$0xf]
    %v54 = vld [vmem:[#allocation5 + $0xc] sm:$0xf]
    %v55 = vld [vmem:[#allocation5 + $0x10] sm:$0xf]
    %v56 = vld [vmem:[#allocation5 + $0x14] sm:$0xf]
    %v57 = vld [vmem:[#allocation5 + $0x18] sm:$0xf]
    %v58 = vld [vmem:[#allocation5 + $0x1c] sm:$0xf]
    %v59 = vld [vmem:[#allocation5 + $0x20] sm:$0xf]
    %v60 = vld [vmem:[#allocation5 + $0x24] sm:$0xf]
    %v61 = vld [vmem:[#allocation5 + $0x28] sm:$0xf]
    %v62 = vld [vmem:[#allocation5 + $0x2c] sm:$0xf]
    %v63 = vld [vmem:[#allocation5 + $0x30] sm:$0xf]
    %v64 = vld [vmem:[#allocation5 + $0x34] sm:$0xf]
    %v65 = vld [vmem:[#allocation5 + $0x38] sm:$0xf]
    %v66 = vld [vmem:[#allocation5 + $0x3c] sm:$0xf]
    %v67 = vld [vmem:[%s2] sm:$0x1]
    %v69 = vlaneseq
    %v70 = vshrl.u32 %v69, 7
    %v71 = vsub.s32 0, %v70
    %v72 = vrot.slane %v67, %v71
    %v81 = vunpack.c.l.b16 %v44
    %v82 = vunpack.c.l.b16 %v45
    %v83 = vunpack.c.l.b16 %v46
    %v84 = vunpack.c.l.b16 %v47
    %v85 = vunpack.c.l.b16 %v48
    %v86 = vunpack.c.l.b16 %v49
    %v87 = vunpack.c.l.b16 %v50
    %v88 = vpack.c.b16 %v82, %v81
    %v89 = vpack.c.b16 %v84, %v83
    %v90 = vpack.c.b16 %v86, %v85
    %v91 = vpack.c.b16 %v87, %v87
    %v112 = vunpack.c.l.b16 %v51
    %v113 = vunpack.c.l.b16 %v52
    %v114 = vunpack.c.l.b16 %v53
    %v115 = vunpack.c.l.b16 %v54
    %v116 = vunpack.c.l.b16 %v55
    %v117 = vunpack.c.l.b16 %v56
    %v118 = vunpack.c.l.b16 %v57
    %v119 = vunpack.c.l.b16 %v58
    %v120 = vunpack.c.l.b16 %v59
    %v121 = vunpack.c.l.b16 %v60
    %v122 = vunpack.c.l.b16 %v61
    %v123 = vunpack.c.l.b16 %v62
    %v124 = vunpack.c.l.b16 %v63
    %v125 = vunpack.c.l.b16 %v64
    %v126 = vunpack.c.l.b16 %v65
    %v127 = vunpack.c.l.b16 %v66
    %v128 = vpack.c.b16 %v113, %v112
    %v129 = vpack.c.b16 %v115, %v114
    %v130 = vpack.c.b16 %v117, %v116
    %v131 = vpack.c.b16 %v119, %v118
    %v132 = vpack.c.b16 %v121, %v120
    %v133 = vpack.c.b16 %v123, %v122
    %v134 = vpack.c.b16 %v125, %v124
    %v135 = vpack.c.b16 %v127, %v126
    %144 = vmatprep.subr.bf16.mxu0 0
    %145 = vmatpush1.bf16.msra.mxu0 %v128
    %146 = vmatprep.subr.bf16.mxu0 0
    %147 = vmatpush1.bf16.msra.mxu0 %v129
    %148 = vmatprep.subr.bf16.mxu0 0
    %149 = vmatpush1.bf16.msra.mxu0 %v130
    %150 = vmatprep.subr.bf16.mxu0 0
    %151 = vmatpush1.bf16.msra.mxu0 %v131
    %152 = vmatprep.subr.bf16.mxu0 0
    %153 = vmatpush1.bf16.msra.mxu0 %v132
    %154 = vmatprep.subr.bf16.mxu0 0
    %155 = vmatpush1.bf16.msra.mxu0 %v133
    %156 = vmatprep.subr.bf16.mxu0 0
    %157 = vmatpush1.bf16.msra.mxu0 %v134
    %158 = vmatprep.subr.bf16.mxu0 0
    %159 = vmatpush1.bf16.msra.mxu0 %v135
    %160 = vmatprep.subr.bf16.mxu0 0
    %161 = vmatpush1.bf16.msra.mxu0 0
    %162 = vmatprep.subr.bf16.mxu0 0
    %163 = vmatpush1.bf16.msra.mxu0 0
    %164 = vmatprep.subr.bf16.mxu0 0
    %165 = vmatpush1.bf16.msra.mxu0 0
    %166 = vmatprep.subr.bf16.mxu0 0
    %167 = vmatpush1.bf16.msra.mxu0 0
    %168 = vmatprep.subr.bf16.mxu0 0
    %169 = vmatpush1.bf16.msra.mxu0 0
    %170 = vmatprep.subr.bf16.mxu0 0
    %171 = vmatpush1.bf16.msra.mxu0 0
    %172 = vmatprep.subr.bf16.mxu0 0
    %173 = vmatpush1.bf16.msra.mxu0 0
    %174 = vmatprep.subr.bf16.mxu0 0
    %175 = vmatpush1.bf16.msra.mxu0 0
    %176 = vmatprep.mubr.bf16.mxu0 0
    %177 = vmatmul.mubr.bf16.gmra.mrb[0].mxu0 %v88
    %v178 = vpop.f32.mrb[0].mxu0
    %v179 = vadd.f32 %v72, %v178
    %v180 = vpop.f32.mrb[0].mxu0
    %v181 = vpop.f32.mrb[0].mxu0
    %v182 = vadd.f32 %v72, %v181
    %v183 = vpop.f32.mrb[0].mxu0
    %184 = vmatprep.mubr.bf16.mxu0 0
    %185 = vmatmul.mubr.bf16.gmra.mrb[0].mxu0 %v89
    %v186 = vpop.f32.mrb[0].mxu0
    %v187 = vadd.f32 %v72, %v186
    %v188 = vpop.f32.mrb[0].mxu0
    %v189 = vpop.f32.mrb[0].mxu0
    %v190 = vadd.f32 %v72, %v189
    %v191 = vpop.f32.mrb[0].mxu0
    %192 = vmatprep.mubr.bf16.mxu0 0
    %193 = vmatmul.mubr.bf16.gmra.mrb[0].mxu0 %v90
    %v194 = vpop.f32.mrb[0].mxu0
    %v195 = vadd.f32 %v72, %v194
    %v196 = vpop.f32.mrb[0].mxu0
    %v197 = vpop.f32.mrb[0].mxu0
    %v198 = vadd.f32 %v72, %v197
    %v199 = vpop.f32.mrb[0].mxu0
    %200 = vmatprep.mubr.bf16.mxu0 0
    %201 = vmatmul.mubr.bf16.gmra.mrb[0].mxu0 %v91
    %v202 = vpop.f32.mrb[0].mxu0
    %v203 = vadd.f32 %v72, %v202
    %v204 = vpop.f32.mrb[0].mxu0
    %v205 = vpop.f32.mrb[0].mxu0
    %v206 = vpop.f32.mrb[0].mxu0
    %207 = vdwg.mxu0
    %208 = vst [vmem:[#allocation7] sm:$0xff] %v179
    %209 = vst [vmem:[#allocation7 + $0x8] sm:$0xff] %v182
    %210 = vst [vmem:[#allocation7 + $0x10] sm:$0xff] %v187
    %211 = vst [vmem:[#allocation7 + $0x18] sm:$0xff] %v190
    %212 = vst [vmem:[#allocation7 + $0x20] sm:$0xff] %v195
    %213 = vst [vmem:[#allocation7 + $0x28] sm:$0xff] %v198
    %214 = vst [vmem:[#allocation7 + $0x30] sm:$0x3] %v203
    // Predicated region
    $region22: #{tpu_custom_call.1} parent=1 // pred_check
      _
    $region23: #{tpu_custom_call.1} parent=1 // pred_check_branch
      %216 = sbr.rel (0) target = $region25
    $region24: #{tpu_custom_call.1} parent=1 // pred_region
      %s218 = ssub.s32 896, 896
      %219 = vsyncadd [#allocation4], %s218
      %s220 = sshll.u32 [#allocation7], 4
      %s221 = int_to_ptr.vmem [resolvable:$true] %s220
      %226 = dma.vmem_to_hbm [thread:$0]  %s221, 896, %s3, [#allocation4], 128, 128, 8
    $region25: #{tpu_custom_call.1} parent=1 // pred_fallthru
      _
    // Predicated region
    $region26: #{tpu_custom_call.1} parent=1 // pred_check
      _
    $region27: #{tpu_custom_call.1} parent=1 // pred_check_branch
      %228 = sbr.rel (0) target = $region29
    $region28: #{tpu_custom_call.1} parent=1 // pred_region
      %229 = dma.done [#allocation4], 896
    $region29: #{tpu_custom_call.1} parent=1 // pred_fallthru
      _
    %230 = vsyncpa [#allocation3], 1
    %231 = vsyncpa [#allocation6], 1
    %232 = vsyncpa [#allocation4], 1

// kernel: tpu_custom_call.1
$region0: #{tpu_custom_call.1}
  #allocation0 [shape = 'u32[]', space=smem, size = 0x4, offset = 0x4, fixed_abs, tag = 'smem constant byte address 0x4 - core index']
  #allocation1 [shape = 'u32[144,128]{1,0:T(1,128)}', space=vmem, size = 0x12000, scoped, tag = 'internal scratch']
  %s0 = inlined_call_operand.hbm [shape: bf16[50,128], index: 0, kind: input, shape index: {}]
  %s1 = inlined_call_operand.hbm [shape: bf16[128,128], index: 1, kind: input, shape index: {}]
  %s2 = inlined_call_operand.vmem [shape: f32[1,128], index: 2, kind: input, shape index: {}]
  %s3 = inlined_call_operand.hbm [shape: f32[50,128], index: 3, kind: output, shape index: {}]
  %s4 = sld [smem:[#allocation0]]
  $region30: #{tpu_custom_call.1} parent=0
    _
  %s6 = ssub.s32 1, %s4
  %s7 = scalar_select 0, %s6, %s4
  $region1: #{tpu_custom_call.1} parent=0
    #allocation2 [shape = 'u8[14336]{0}', space=vmem, size = 0x3800, scoped, tag = 'input window, operand 0, single buffered']
    #allocation3 [shape = 's32[1]{0}', space=sflag, size = 0x4, scoped, tag = 'scoped memory for tpu_custom_call.1']
    #allocation4 [shape = 's32[1]{0}', space=sflag, size = 0x4, scoped, tag = 'scoped memory for tpu_custom_call.1']
    #allocation5 [shape = 'u8[32768]{0}', space=vmem, size = 0x8000, scoped, tag = 'input window, operand 1, single buffered']
    #allocation6 [shape = 's32[1]{0}', space=sflag, size = 0x4, scoped, tag = 'scoped memory for tpu_custom_call.1']
    #allocation7 [shape = 'u8[28672]{0}', space=vmem, size = 0x7000, scoped, tag = 'output window, operand 0, single buffered']
    %8 = vsyncpa [#allocation3], 0
    %9 = vsyncpa [#allocation6], 0
    %10 = vsyncpa [#allocation4], 0
    // Predicated region
    $region2: #{tpu_custom_call.1} parent=1 // pred_check
      _
    $region3: #{tpu_custom_call.1} parent=1 // pred_check_branch
      %12 = sbr.rel (0) target = $region5
    $region4: #{tpu_custom_call.1} parent=1 // pred_region
      %s14 = ssub.s32 448, 448
      %15 = vsyncadd [#allocation3], %s14
      %s16 = sshll.u32 [#allocation2], 4
      %s17 = int_to_ptr.vmem [resolvable:$true] %s16
      %22 = dma.hbm_to_vmem [thread:$0]  %s0, 448, %s17, [#allocation3], 64, 64, 4
    $region5: #{tpu_custom_call.1} parent=1 // pred_fallthru
      _
    // Predicated region
    $region6: #{tpu_custom_call.1} parent=1 // pred_check
      _
    $region7: #{tpu_custom_call.1} parent=1 // pred_check_branch
      %24 = sbr.rel (0) target = $region9
    $region8: #{tpu_custom_call.1} parent=1 // pred_region
      %s26 = ssub.s32 1024, 1024
      %27 = vsyncadd [#allocation6], %s26
      %s28 = sshll.u32 [#allocation5], 4
      %s29 = int_to_ptr.vmem [resolvable:$true] %s28
      %34 = dma.hbm_to_vmem [thread:$0]  %s1, 1024, %s29, [#allocation6], 64, 64, 4
    $region9: #{tpu_custom_call.1} parent=1 // pred_fallthru
      _
    // Predicated region
    $region10: #{tpu_custom_call.1} parent=1 // pred_check
      _
    $region11: #{tpu_custom_call.1} parent=1 // pred_check_branch
      %36 = sbr.rel (0) target = $region13
    $region12: #{tpu_custom_call.1} parent=1 // pred_region
      _
    $region13: #{tpu_custom_call.1} parent=1 // pred_fallthru
      _
    // Predicated region
    $region14: #{tpu_custom_call.1} parent=1 // pred_check
      _
    $region15: #{tpu_custom_call.1} parent=1 // pred_check_branch
      %38 = sbr.rel (0) target = $region17
    $region16: #{tpu_custom_call.1} parent=1 // pred_region
      %39 = dma.done [#allocation3], 448
    $region17: #{tpu_custom_call.1} parent=1 // pred_fallthru
      _
    // Predicated region
    $region18: #{tpu_custom_call.1} parent=1 // pred_check
      _
    $region19: #{tpu_custom_call.1} parent=1 // pred_check_branch
      %41 = sbr.rel (0) target = $region21
    $region20: #{tpu_custom_call.1} parent=1 // pred_region
      %42 = dma.done [#allocation6], 1024
    $region21: #{tpu_custom_call.1} parent=1 // pred_fallthru
      _
    %v44 = vld [vmem:[#allocation2] sm:$0xf]
    %v45 = vld [vmem:[#allocation2 + $0x4] sm:$0xf]
    %v46 = vld [vmem:[#allocation2 + $0x8] sm:$0xf]
    %v47 = vld [vmem:[#allocation2 + $0xc] sm:$0xf]
    %v48 = vld [vmem:[#allocation2 + $0x10] sm:$0xf]
    %v49 = vld [vmem:[#allocation2 + $0x14] sm:$0xf]
    %v50 = vld [vmem:[#allocation2 + $0x18] sm:$0x1]
    %v51 = vld [vmem:[#allocation5] sm:$0xf]
    %v52 = vld [vmem:[#allocation5 + $0x4] sm:$0xf]
    %v53 = vld [vmem:[#allocation5 + $0x8] sm:$0xf]
    %v54 = vld [vmem:[#allocation5 + $0xc] sm:$0xf]
    %v55 = vld [vmem:[#allocation5 + $0x10] sm:$0xf]
    %v56 = vld [vmem:[#allocation5 + $0x14] sm:$0xf]
    %v57 = vld [vmem:[#allocation5 + $0x18] sm:$0xf]
    %v58 = vld [vmem:[#allocation5 + $0x1c] sm:$0xf]
    %v59 = vld [vmem:[#allocation5 + $0x20] sm:$0xf]
    %v60 = vld [vmem:[#allocation5 + $0x24] sm:$0xf]
    %v61 = vld [vmem:[#allocation5 + $0x28] sm:$0xf]
    %v62 = vld [vmem:[#allocation5 + $0x2c] sm:$0xf]
    %v63 = vld [vmem:[#allocation5 + $0x30] sm:$0xf]
    %v64 = vld [vmem:[#allocation5 + $0x34] sm:$0xf]
    %v65 = vld [vmem:[#allocation5 + $0x38] sm:$0xf]
    %v66 = vld [vmem:[#allocation5 + $0x3c] sm:$0xf]
    %v67 = vld [vmem:[%s2] sm:$0x1]
    %v69 = vlaneseq
    %v70 = vshrl.u32 %v69, 7
    %v71 = vsub.s32 0, %v70
    %v72 = vrot.slane %v67, %v71
    %v81 = vunpack.c.l.b16 %v44
    %v82 = vunpack.c.l.b16 %v45
    %v83 = vunpack.c.l.b16 %v46
    %v84 = vunpack.c.l.b16 %v47
    %v85 = vunpack.c.l.b16 %v48
    %v86 = vunpack.c.l.b16 %v49
    %v87 = vunpack.c.l.b16 %v50
    %v88 = vpack.c.b16 %v82, %v81
    %v89 = vpack.c.b16 %v84, %v83
    %v90 = vpack.c.b16 %v86, %v85
    %v91 = vpack.c.b16 %v87, %v87
    %v112 = vunpack.c.l.b16 %v51
    %v113 = vunpack.c.l.b16 %v52
    %v114 = vunpack.c.l.b16 %v53
    %v115 = vunpack.c.l.b16 %v54
    %v116 = vunpack.c.l.b16 %v55
    %v117 = vunpack.c.l.b16 %v56
    %v118 = vunpack.c.l.b16 %v57
    %v119 = vunpack.c.l.b16 %v58
    %v120 = vunpack.c.l.b16 %v59
    %v121 = vunpack.c.l.b16 %v60
    %v122 = vunpack.c.l.b16 %v61
    %v123 = vunpack.c.l.b16 %v62
    %v124 = vunpack.c.l.b16 %v63
    %v125 = vunpack.c.l.b16 %v64
    %v126 = vunpack.c.l.b16 %v65
    %v127 = vunpack.c.l.b16 %v66
    %v128 = vpack.c.b16 %v113, %v112
    %v129 = vpack.c.b16 %v115, %v114
    %v130 = vpack.c.b16 %v117, %v116
    %v131 = vpack.c.b16 %v119, %v118
    %v132 = vpack.c.b16 %v121, %v120
    %v133 = vpack.c.b16 %v123, %v122
    %v134 = vpack.c.b16 %v125, %v124
    %v135 = vpack.c.b16 %v127, %v126
    %144 = vmatprep.subr.bf16.mxu0 0
    %145 = vmatpush1.bf16.msra.mxu0 %v128
    %146 = vmatprep.subr.bf16.mxu0 0
    %147 = vmatpush1.bf16.msra.mxu0 %v129
    %148 = vmatprep.subr.bf16.mxu0 0
    %149 = vmatpush1.bf16.msra.mxu0 %v130
    %150 = vmatprep.subr.bf16.mxu0 0
    %151 = vmatpush1.bf16.msra.mxu0 %v131
    %152 = vmatprep.subr.bf16.mxu0 0
    %153 = vmatpush1.bf16.msra.mxu0 %v132
    %154 = vmatprep.subr.bf16.mxu0 0
    %155 = vmatpush1.bf16.msra.mxu0 %v133
    %156 = vmatprep.subr.bf16.mxu0 0
    %157 = vmatpush1.bf16.msra.mxu0 %v134
    %158 = vmatprep.subr.bf16.mxu0 0
    %159 = vmatpush1.bf16.msra.mxu0 %v135
    %160 = vmatprep.subr.bf16.mxu0 0
    %161 = vmatpush1.bf16.msra.mxu0 0
    %162 = vmatprep.subr.bf16.mxu0 0
    %163 = vmatpush1.bf16.msra.mxu0 0
    %164 = vmatprep.subr.bf16.mxu0 0
    %165 = vmatpush1.bf16.msra.mxu0 0
    %166 = vmatprep.subr.bf16.mxu0 0
    %167 = vmatpush1.bf16.msra.mxu0 0
    %168 = vmatprep.subr.bf16.mxu0 0
    %169 = vmatpush1.bf16.msra.mxu0 0
    %170 = vmatprep.subr.bf16.mxu0 0
    %171 = vmatpush1.bf16.msra.mxu0 0
    %172 = vmatprep.subr.bf16.mxu0 0
    %173 = vmatpush1.bf16.msra.mxu0 0
    %174 = vmatprep.subr.bf16.mxu0 0
    %175 = vmatpush1.bf16.msra.mxu0 0
    %176 = vmatprep.mubr.bf16.mxu0 0
    %177 = vmatmul.mubr.bf16.gmra.mrb[0].mxu0 %v88
    %v178 = vpop.f32.mrb[0].mxu0
    %v179 = vadd.f32 %v72, %v178
    %v180 = vpop.f32.mrb[0].mxu0
    %v181 = vpop.f32.mrb[0].mxu0
    %v182 = vadd.f32 %v72, %v181
    %v183 = vpop.f32.mrb[0].mxu0
    %184 = vmatprep.mubr.bf16.mxu0 0
    %185 = vmatmul.mubr.bf16.gmra.mrb[0].mxu0 %v89
    %v186 = vpop.f32.mrb[0].mxu0
    %v187 = vadd.f32 %v72, %v186
    %v188 = vpop.f32.mrb[0].mxu0
    %v189 = vpop.f32.mrb[0].mxu0
    %v190 = vadd.f32 %v72, %v189
    %v191 = vpop.f32.mrb[0].mxu0
    %192 = vmatprep.mubr.bf16.mxu0 0
    %193 = vmatmul.mubr.bf16.gmra.mrb[0].mxu0 %v90
    %v194 = vpop.f32.mrb[0].mxu0
    %v195 = vadd.f32 %v72, %v194
    %v196 = vpop.f32.mrb[0].mxu0
    %v197 = vpop.f32.mrb[0].mxu0
    %v198 = vadd.f32 %v72, %v197
    %v199 = vpop.f32.mrb[0].mxu0
    %200 = vmatprep.mubr.bf16.mxu0 0
    %201 = vmatmul.mubr.bf16.gmra.mrb[0].mxu0 %v91
    %v202 = vpop.f32.mrb[0].mxu0
    %v203 = vadd.f32 %v72, %v202
    %v204 = vpop.f32.mrb[0].mxu0
    %v205 = vpop.f32.mrb[0].mxu0
    %v206 = vpop.f32.mrb[0].mxu0
    %207 = vdwg.mxu0
    %208 = vst [vmem:[#allocation7] sm:$0xff] %v179
    %209 = vst [vmem:[#allocation7 + $0x8] sm:$0xff] %v182
    %210 = vst [vmem:[#allocation7 + $0x10] sm:$0xff] %v187
    %211 = vst [vmem:[#allocation7 + $0x18] sm:$0xff] %v190
    %212 = vst [vmem:[#allocation7 + $0x20] sm:$0xff] %v195
    %213 = vst [vmem:[#allocation7 + $0x28] sm:$0xff] %v198
    %214 = vst [vmem:[#allocation7 + $0x30] sm:$0x3] %v203
    // Predicated region
    $region22: #{tpu_custom_call.1} parent=1 // pred_check
      _
    $region23: #{tpu_custom_call.1} parent=1 // pred_check_branch
      %216 = sbr.rel (0) target = $region25
    $region24: #{tpu_custom_call.1} parent=1 // pred_region
      %s218 = ssub.s32 896, 896
      %219 = vsyncadd [#allocation4], %s218
      %s220 = sshll.u32 [#allocation7], 4
      %s221 = int_to_ptr.vmem [resolvable:$true] %s220
      %226 = dma.vmem_to_hbm [thread:$0]  %s221, 896, %s3, [#allocation4], 128, 128, 8
    $region25: #{tpu_custom_call.1} parent=1 // pred_fallthru
      _
    // Predicated region
    $region26: #{tpu_custom_call.1} parent=1 // pred_check
      _
    $region27: #{tpu_custom_call.1} parent=1 // pred_check_branch
      %228 = sbr.rel (0) target = $region29
    $region28: #{tpu_custom_call.1} parent=1 // pred_region
      %229 = dma.done [#allocation4], 896
    $region29: #{tpu_custom_call.1} parent=1 // pred_fallthru
      _
    %230 = vsyncpa [#allocation3], 1
    %231 = vsyncpa [#allocation6], 1
    %232 = vsyncpa [#allocation4], 1

</llo_original>
